<compile_context>
chip_gen: v7x
topology: tpu7x:2x2x1
jax: 0.10.0
libtpu: 0.0.40
codegen_flags: <defaults>
</compile_context>

<pallas_src>
import jax
import jax.numpy as jnp
from jax import lax
from jax.experimental import pallas as pl
from jax.experimental.pallas import tpu as pltpu

LANES = 128
SUBLANES = 8


def _round_up(a, b):
    return (a + b - 1) // b * b


def _tpu_kind():
    try:
        return jax.devices()[0].device_kind.lower()
    except Exception:
        return ""


def _make_mse_kernel(*, rows, tile_rows, inner, chunk, mask_rows):
    """Kernel producing a resident (8, 128) f32 partial-sum block per partition."""
    nchunks = tile_rows // chunk  # static; tile_rows % chunk == 0 by construction

    def kernel(x_ref, y_ref, o_ref):
        # Zero the resident accumulator at the start of each reduction run.
        @pl.when(pl.program_id(1) == 0)
        def _():
            o_ref[...] = jnp.zeros_like(o_ref)

        # Global row offset of this (tile_rows, 128) tile (un-clamped on
        # purpose: phantom / ragged tiles get fully masked below).
        row0 = (pl.program_id(0) * inner + pl.program_id(1)) * tile_rows
        base_rid = (
            lax.broadcasted_iota(jnp.int32, (chunk, LANES), 0) if mask_rows else None
        )

        def body(c, acc):
            start = pl.multiple_of(c * chunk, chunk)
            xs = x_ref[pl.ds(start, chunk), :].astype(jnp.float32)
            ys = y_ref[pl.ds(start, chunk), :].astype(jnp.float32)
            d = xs - ys
            sq = d * d
            if mask_rows:
                rid = base_rid + (row0 + c * chunk)
                sq = jnp.where(rid < rows, sq, 0.0)  # zero OOB / padded rows
            return acc + sq

        # Unrolled chunk loop: intermediates stay (chunk, 128) = a few vregs,
        # so the VALU work hides under the tile DMA and nothing spills.
        acc = lax.fori_loop(
            0, nchunks, body, jnp.zeros((chunk, LANES), jnp.float32), unroll=True
        )
        # Fold the (chunk, 128) partial into the resident (8, 128) accumulator
        # (pure per-vreg adds; no cross-lane work).
        o_ref[...] += jnp.sum(acc.reshape(chunk // SUBLANES, SUBLANES, LANES), axis=0)

    return kernel


def mse_loss(x, y, *, tile_rows=None, num_parallel=None, interpret=False):
    """mean((x - y) ** 2) over all elements, via a Pallas TPU kernel."""
    if x.shape != y.shape:
        raise ValueError("x and y must have the same shape")
    n = x.size

    # Result dtype follows the promoted floating dtype (torch.mean semantics).
    out_dtype = jnp.promote_types(x.dtype, y.dtype)
    if not jnp.issubdtype(out_dtype, jnp.floating):
        out_dtype = jnp.dtype(jnp.float32)
    out_dtype = jnp.dtype(out_dtype)
    if out_dtype.itemsize > 4:  # no f64 on TPU
        out_dtype = jnp.dtype(jnp.float32)

    if n == 0:
        return jnp.array(float("nan"), out_dtype)

    kind = _tpu_kind()
    is_v7 = "v7" in kind

    # ---- layout: lane-dense (rows, 128); common case is copy-free -----------
    padded_n = max(_round_up(n, LANES), SUBLANES * LANES)
    rows = padded_n // LANES  # >= 8

    # Stream the native floating dtype (halves HBM bytes for bf16/f16); for
    # tiny inputs keep f32 so every tile shape stays trivially legal.
    stream_dtype = out_dtype
    if stream_dtype.itemsize < 4 and rows < 64:
        stream_dtype = jnp.dtype(jnp.float32)

    xf = jnp.ravel(x).astype(stream_dtype)
    yf = jnp.ravel(y).astype(stream_dtype)
    if padded_n != n:
        # Rare path (lane-unaligned or <1024-element inputs): one small copy.
        # Both operands padded with zeros -> padding contributes (0-0)^2 = 0
        # and we divide by the true n below.
        pad = padded_n - n
        xf = jnp.pad(xf, (0, pad))
        yf = jnp.pad(yf, (0, pad))
    x2 = xf.reshape(rows, LANES)
    y2 = yf.reshape(rows, LANES)

    # ---- tile / grid selection ----------------------------------------------
    if tile_rows is None:
        nominal = 4096 if is_v7 else 2048  # 1-2 MiB f32 per input block
    else:
        nominal = int(tile_rows)
    if rows >= 64:
        tr = max(64, min(nominal, (rows // 64) * 64))
    else:
        tr = (rows // SUBLANES) * SUBLANES
    tr = max(SUBLANES, (tr // SUBLANES) * SUBLANES)  # sanitize user overrides
    chunk = 64 if tr % 64 == 0 else SUBLANES

    nblocks = pl.cdiv(rows, tr)
    if num_parallel is None:
        num_parallel = 2 if is_v7 else 1  # engage both TCs only on v7x
    num_parallel = max(1, min(int(num_parallel), nblocks))
    inner = pl.cdiv(nblocks, num_parallel)
    # Mask needed iff the iterated tiles over-cover the valid row range
    # (ragged last tile and/or phantom tiles of an uneven partition).
    mask_rows = (num_parallel * inner * tr) != rows

    if is_v7 and num_parallel > 1:
        # Split the outer row-range axis across both TensorCores (per-TC HBM BW).
        dim_sem = (pltpu.CORE_PARALLEL, pltpu.ARBITRARY)
    else:
        dim_sem = ("parallel", "arbitrary")

    itemsize = jnp.dtype(stream_dtype).itemsize
    cost = pl.CostEstimate(
        flops=3 * n,  # sub + mul + accumulate per element
        transcendentals=0,
        bytes_accessed=2 * rows * LANES * itemsize
        + num_parallel * SUBLANES * LANES * 4,
    )

    kernel = _make_mse_kernel(
        rows=rows, tile_rows=tr, inner=inner, chunk=chunk, mask_rows=mask_rows
    )
    # Clamp the block index so even phantom tiles stay in-bounds (their
    # contribution is zeroed by the in-kernel mask).
    in_spec = pl.BlockSpec(
        (tr, LANES), lambda p, i: (jnp.minimum(p * inner + i, nblocks - 1), 0)
    )

    partial = pl.pallas_call(
        kernel,
        out_shape=jax.ShapeDtypeStruct((num_parallel * SUBLANES, LANES), jnp.float32),
        grid=(num_parallel, inner),
        in_specs=[in_spec, in_spec],
        out_specs=pl.BlockSpec((SUBLANES, LANES), lambda p, i: (p, 0)),
        compiler_params=pltpu.CompilerParams(dimension_semantics=dim_sem),
        cost_estimate=cost,
        interpret=interpret,
    )(x2, y2)

    # Tiny epilogue: reduce the lane-dense partial sums and apply the mean.
    total = jnp.sum(partial, dtype=jnp.float32)
    return (total / jnp.float32(n)).astype(out_dtype)


if __name__ == "__main__":
    key = jax.random.PRNGKey(0)
    kx, ky = jax.random.split(key)
    shape = (2, 4, 16, 16)
    x = jax.random.normal(kx, shape, jnp.float32)
    y = jax.random.normal(ky, shape, jnp.float32)

    loss = mse_loss(x, y)
    loss = jax.block_until_ready(loss)

    ref = jnp.mean((x - y) ** 2)
    assert loss.shape == ()
    assert jnp.allclose(loss, ref, rtol=1e-5, atol=1e-6), (loss, ref)

    print("KERNEL_OK")
</pallas_src>

<mosaic_0001>
module attributes {stable_mosaic.version = 11 : i64} {
  func.func @kernel(%arg0: i32, %arg1: i32, %arg2: memref<16x128xf32, #tpu.memory_space<vmem>>, %arg3: memref<16x128xf32, #tpu.memory_space<vmem>>, %arg4: memref<8x128xf32, #tpu.memory_space<vmem>>) attributes {dimension_semantics = [#tpu.dimension_semantics<parallel>, #tpu.dimension_semantics<arbitrary>], iteration_bounds = array<i64: 1, 1>, scalar_prefetch = 0 : i64, scratch_operands = 0 : i64, tpu.core_type = #tpu.core_type<tc>, window_params = [{transform_indices = @transform_0, window_bounds = array<i64: 16, 128>}, {transform_indices = @transform_1, window_bounds = array<i64: 16, 128>}, {transform_indices = @transform_2, window_bounds = array<i64: 8, 128>}]} {
    %c0_i32 = arith.constant 0 : i32
    %0 = arith.cmpi eq, %arg1, %c0_i32 : i32
    %1 = arith.extui %0 : i1 to i32
    %c0_i32_0 = arith.constant 0 : i32
    %2 = arith.cmpi ne, %1, %c0_i32_0 : i32
    scf.if %2 {
      %cst_11 = arith.constant 0.000000e+00 : f32
      %27 = vector.broadcast %cst_11 : f32 to vector<8x128xf32>
      %c0_12 = arith.constant 0 : index
      %c0_13 = arith.constant 0 : index
      %28 = vector.load %arg4[%c0_12, %c0_13] : memref<8x128xf32, #tpu.memory_space<vmem>>, vector<8x128xf32>
      tpu.vector_store %arg4[%c0_12, %c0_13], %27 {strides = array<i32>} : memref<8x128xf32, #tpu.memory_space<vmem>>, vector<8x128xf32>,
    } else {
    }
    %cst = arith.constant 0.000000e+00 : f32
    %3 = vector.broadcast %cst : f32 to vector<8x128xf32>
    %c0_i32_1 = arith.constant 0 : i32
    %c8_i32 = arith.constant 8 : i32
    %4 = arith.muli %c0_i32_1, %c8_i32 : i32
    %5 = tpu.assume_multiple %4, 8 : i32
    %6 = arith.index_cast %5 : i32 to index
    %c0 = arith.constant 0 : index
    %7 = vector.load %arg2[%6, %c0] : memref<16x128xf32, #tpu.memory_space<vmem>>, vector<8x128xf32>
    %8 = arith.index_cast %5 : i32 to index
    %c0_2 = arith.constant 0 : index
    %9 = vector.load %arg3[%8, %c0_2] : memref<16x128xf32, #tpu.memory_space<vmem>>, vector<8x128xf32>
    %10 = arith.subf %7, %9 : vector<8x128xf32>
    %11 = arith.mulf %10, %10 : vector<8x128xf32>
    %12 = arith.addf %3, %11 : vector<8x128xf32>
    %c1_i32 = arith.constant 1 : i32
    %c8_i32_3 = arith.constant 8 : i32
    %13 = arith.muli %c1_i32, %c8_i32_3 : i32
    %14 = tpu.assume_multiple %13, 8 : i32
    %15 = arith.index_cast %14 : i32 to index
    %c0_4 = arith.constant 0 : index
    %16 = vector.load %arg2[%15, %c0_4] : memref<16x128xf32, #tpu.memory_space<vmem>>, vector<8x128xf32>
    %17 = arith.index_cast %14 : i32 to index
    %c0_5 = arith.constant 0 : index
    %18 = vector.load %arg3[%17, %c0_5] : memref<16x128xf32, #tpu.memory_space<vmem>>, vector<8x128xf32>
    %19 = arith.subf %16, %18 : vector<8x128xf32>
    %20 = arith.mulf %19, %19 : vector<8x128xf32>
    %21 = arith.addf %12, %20 : vector<8x128xf32>
    %c2_i32 = arith.constant 2 : i32
    %c0_6 = arith.constant 0 : index
    %c0_7 = arith.constant 0 : index
    %22 = vector.load %arg4[%c0_6, %c0_7] : memref<8x128xf32, #tpu.memory_space<vmem>>, vector<8x128xf32>
    %23 = vector.shape_cast %21 : vector<8x128xf32> to vector<1x8x128xf32>
    %cst_8 = arith.constant dense<0.000000e+00> : vector<8x128xf32>
    %24 = vector.multi_reduction <add>, %23, %cst_8 [0] : vector<1x8x128xf32> to vector<8x128xf32>
    %25 = arith.addf %22, %24 : vector<8x128xf32>
    %c0_9 = arith.constant 0 : index
    %c0_10 = arith.constant 0 : index
    %26 = vector.load %arg4[%c0_9, %c0_10] : memref<8x128xf32, #tpu.memory_space<vmem>>, vector<8x128xf32>
    tpu.vector_store %arg4[%c0_9, %c0_10], %25 {strides = array<i32>} : memref<8x128xf32, #tpu.memory_space<vmem>>, vector<8x128xf32>,
    return
  }
  func.func @transform_0(%arg0: i32, %arg1: i32) -> (i32, i32) {
    %c1_i32 = arith.constant 1 : i32
    %0 = arith.muli %arg0, %c1_i32 : i32
    %1 = arith.addi %0, %arg1 : i32
    %c0_i32 = arith.constant 0 : i32
    %2 = arith.minsi %1, %c0_i32 : i32
    %c0_i32_0 = arith.constant 0 : i32
    %c0_i32_1 = arith.constant 0 : i32
    return %2, %c0_i32_0 : i32, i32
  }
  func.func @transform_1(%arg0: i32, %arg1: i32) -> (i32, i32) {
    %c1_i32 = arith.constant 1 : i32
    %0 = arith.muli %arg0, %c1_i32 : i32
    %1 = arith.addi %0, %arg1 : i32
    %c0_i32 = arith.constant 0 : i32
    %2 = arith.minsi %1, %c0_i32 : i32
    %c0_i32_0 = arith.constant 0 : i32
    %c0_i32_1 = arith.constant 0 : i32
    return %2, %c0_i32_0 : i32, i32
  }
  func.func @transform_2(%arg0: i32, %arg1: i32) -> (i32, i32) {
    %c0_i32 = arith.constant 0 : i32
    %c0_i32_0 = arith.constant 0 : i32
    return %arg0, %c0_i32 : i32, i32
  }
}

</mosaic_0001>

<llo_original>
// kernel: tpu_custom_call.1
$region0: #{tpu_custom_call.1}
  #allocation0 [shape = 'u32[]', space=smem, size = 0x4, offset = 0x4, fixed_abs, tag = 'smem constant byte address 0x4 - core index']
  #allocation1 [shape = 'u32[144,128]{1,0:T(1,128)}', space=vmem, size = 0x12000, scoped, tag = 'internal scratch']
  %s0 = inlined_call_operand.hbm [shape: f32[16,128], index: 0, kind: input, shape index: {}]
  %s1 = inlined_call_operand.hbm [shape: f32[16,128], index: 1, kind: input, shape index: {}]
  %s2 = inlined_call_operand.hbm [shape: f32[8,128], index: 2, kind: output, shape index: {}]
  %s3 = sld [smem:[#allocation0]]
  $region30: #{tpu_custom_call.1} parent=0
    _
  %s5 = ssub.s32 1, %s3
  %s6 = scalar_select 0, %s5, %s3
  $region1: #{tpu_custom_call.1} parent=0
    #allocation2 [shape = 'u8[8192]{0}', space=vmem, size = 0x2000, scoped, tag = 'input window, operand 0, single buffered']
    #allocation3 [shape = 's32[1]{0}', space=sflag, size = 0x4, scoped, tag = 'scoped memory for tpu_custom_call.1']
    #allocation4 [shape = 's32[1]{0}', space=sflag, size = 0x4, scoped, tag = 'scoped memory for tpu_custom_call.1']
    #allocation5 [shape = 'u8[8192]{0}', space=vmem, size = 0x2000, scoped, tag = 'input window, operand 1, single buffered']
    #allocation6 [shape = 's32[1]{0}', space=sflag, size = 0x4, scoped, tag = 'scoped memory for tpu_custom_call.1']
    #allocation7 [shape = 'u8[4096]{0}', space=vmem, size = 0x1000, scoped, tag = 'output window, operand 0, single buffered']
    %7 = vsyncpa [#allocation3], 0
    %8 = vsyncpa [#allocation6], 0
    %9 = vsyncpa [#allocation4], 0
    // Predicated region
    $region2: #{tpu_custom_call.1} parent=1 // pred_check
      _
    $region3: #{tpu_custom_call.1} parent=1 // pred_check_branch
      %11 = sbr.rel (0) target = $region5
    $region4: #{tpu_custom_call.1} parent=1 // pred_region
      %s12 = sadd.s32 0, 0
      %p13 = scmp.lt.s32.totalorder %s12, 0
      %s14 = scalar_select %p13, %s12, 0
      %s15 = smul.u32 2, %s14
      %s17 = ssub.s32 256, 256
      %18 = vsyncadd [#allocation3], %s17
      %s19 = smul.addr %s15, 128
      %s20 = scalar_lea.hbm %s0, %s19
      %s21 = sshll.u32 [#allocation2], 4
      %s22 = int_to_ptr.vmem [resolvable:$true] %s21
      %27 = dma.hbm_to_vmem [thread:$0]  %s20, 256, %s22, [#allocation3], 128, 128, 8
    $region5: #{tpu_custom_call.1} parent=1 // pred_fallthru
      _
    // Predicated region
    $region6: #{tpu_custom_call.1} parent=1 // pred_check
      _
    $region7: #{tpu_custom_call.1} parent=1 // pred_check_branch
      %29 = sbr.rel (0) target = $region9
    $region8: #{tpu_custom_call.1} parent=1 // pred_region
      %s30 = sadd.s32 0, 0
      %p31 = scmp.lt.s32.totalorder %s30, 0
      %s32 = scalar_select %p31, %s30, 0
      %s33 = smul.u32 2, %s32
      %s35 = ssub.s32 256, 256
      %36 = vsyncadd [#allocation6], %s35
      %s37 = smul.addr %s33, 128
      %s38 = scalar_lea.hbm %s1, %s37
      %s39 = sshll.u32 [#allocation5], 4
      %s40 = int_to_ptr.vmem [resolvable:$true] %s39
      %45 = dma.hbm_to_vmem [thread:$0]  %s38, 256, %s40, [#allocation6], 128, 128, 8
    $region9: #{tpu_custom_call.1} parent=1 // pred_fallthru
      _
    // Predicated region
    $region10: #{tpu_custom_call.1} parent=1 // pred_check
      _
    $region11: #{tpu_custom_call.1} parent=1 // pred_check_branch
      %47 = sbr.rel (0) target = $region13
    $region12: #{tpu_custom_call.1} parent=1 // pred_region
      %48 = dma.done [#allocation3], 256
    $region13: #{tpu_custom_call.1} parent=1 // pred_fallthru
      _
    // Predicated region
    $region14: #{tpu_custom_call.1} parent=1 // pred_check
      _
    $region15: #{tpu_custom_call.1} parent=1 // pred_check_branch
      %50 = sbr.rel (0) target = $region17
    $region16: #{tpu_custom_call.1} parent=1 // pred_region
      %51 = dma.done [#allocation6], 256
    $region17: #{tpu_custom_call.1} parent=1 // pred_fallthru
      _
    %s52 = sadd.s32 0, 0
    %p53 = scmp.lt.s32.totalorder %s52, 0
    %s54 = scalar_select %p53, %s52, 0
    %s55 = smul.u32 2, %s54
    %s56 = sadd.s32 0, 0
    %p57 = scmp.lt.s32.totalorder %s56, 0
    %s58 = scalar_select %p57, %s56, 0
    %s59 = smul.u32 2, %s58
    %p60 = scmp.eq.s32.totalorder 0, 0
    // Predicated region
    $region18: #{tpu_custom_call.1} parent=1 // pred_check
      %p61 = pneg %p60
    $region19: #{tpu_custom_call.1} parent=1 // pred_check_branch
      %63 = sbr.rel (%p61) target = $region21
    $region20: #{tpu_custom_call.1} parent=1 // pred_region
      %64 = vst [vmem:[#allocation7] sm:$0xff] 0.0
    $region21: #{tpu_custom_call.1} parent=1 // pred_fallthru
      _
    %v65 = vld [vmem:[#allocation2] sm:$0xff]
    %v66 = vld [vmem:[#allocation5] sm:$0xff]
    %v67 = vsub.f32 %v65, %v66
    %v68 = vmul.f32 %v67, %v67
    %v69 = vadd.f32 %v68, 0.0
    %s70 = scalar_lea.vmem [#allocation2], 8
    %v71 = vld [vmem:[%s70] sm:$0xff]
    %s72 = scalar_lea.vmem [#allocation5], 8
    %v73 = vld [vmem:[%s72] sm:$0xff]
    %v74 = vsub.f32 %v71, %v73
    %v75 = vmul.f32 %v74, %v74
    %v76 = vadd.f32 %v69, %v75
    %v77 = vld [vmem:[#allocation7] sm:$0xff]
    %v78 = vadd.f32 %v76, 0.0
    %v79 = vadd.f32 %v77, %v78
    %80 = vst [vmem:[#allocation7] sm:$0xff] %v79
    // Predicated region
    $region22: #{tpu_custom_call.1} parent=1 // pred_check
      _
    $region23: #{tpu_custom_call.1} parent=1 // pred_check_branch
      %82 = sbr.rel (0) target = $region25
    $region24: #{tpu_custom_call.1} parent=1 // pred_region
      %s84 = ssub.s32 128, 128
      %85 = vsyncadd [#allocation4], %s84
      %s87 = sshll.u32 [#allocation7], 4
      %s88 = int_to_ptr.vmem [resolvable:$true] %s87
      %90 = dma.vmem_to_hbm [thread:$0]  %s88, 128, %s2, [#allocation4]
    $region25: #{tpu_custom_call.1} parent=1 // pred_fallthru
      _
    // Predicated region
    $region26: #{tpu_custom_call.1} parent=1 // pred_check
      _
    $region27: #{tpu_custom_call.1} parent=1 // pred_check_branch
      %92 = sbr.rel (0) target = $region29
    $region28: #{tpu_custom_call.1} parent=1 // pred_region
      %93 = dma.done [#allocation4], 128
    $region29: #{tpu_custom_call.1} parent=1 // pred_fallthru
      _
    %94 = vsyncpa [#allocation3], 1
    %95 = vsyncpa [#allocation6], 1
    %96 = vsyncpa [#allocation4], 1

</llo_original>
